<compile_context>
chip_gen: v5e
topology: v5e:2x2
jax: 0.10.0
libtpu: 0.0.40
codegen_flags: <defaults>
</compile_context>

<pallas_src>
import functools
import math

import jax
import jax.numpy as jnp
from jax.experimental import pallas as pl
from jax.experimental.pallas import tpu as pltpu


def _round_up(x, m):
    return ((x + m - 1) // m) * m


def _gcn_layer_kernel(a_ref, x_ref, w_ref, alpha_ref, out_ref):
    """out_rows = PReLU((A_rows @ X) @ W) for one row tile of A."""
    ax = jnp.dot(a_ref[...], x_ref[...], preferred_element_type=jnp.float32)
    h = jnp.dot(ax, w_ref[...], preferred_element_type=jnp.float32)
    alpha = alpha_ref[0]                                    # scalar PReLU slope (SMEM)
    out_ref[...] = jnp.where(h >= 0.0, h, alpha * h).astype(out_ref.dtype)


def _gcn_layer(a_pad, x_pad, w_pad, alpha, *, tm):
    """One GCN layer: PReLU((A @ X) @ W), row-tiled over the (padded) node axis."""
    n_pad = a_pad.shape[0]
    d_in = x_pad.shape[1]
    d_out = w_pad.shape[1]
    grid = (n_pad // tm,)

    flops = 2 * n_pad * n_pad * d_in + 2 * n_pad * d_in * d_out
    bytes_accessed = 4 * (n_pad * n_pad + n_pad * d_in + d_in * d_out + n_pad * d_out)

    grid_spec = pltpu.PrefetchScalarGridSpec(
        num_scalar_prefetch=0,
        grid=grid,
        in_specs=[
            pl.BlockSpec((tm, n_pad), lambda i: (i, 0)),            # A row tile
            pl.BlockSpec((n_pad, d_in), lambda i: (0, 0)),          # X (resident)
            pl.BlockSpec((d_in, d_out), lambda i: (0, 0)),          # W (resident)
            pl.BlockSpec(memory_space=pltpu.MemorySpace.SMEM),      # PReLU slope
        ],
        out_specs=pl.BlockSpec((tm, d_out), lambda i: (i, 0)),
    )

    return pl.pallas_call(
        _gcn_layer_kernel,
        out_shape=jax.ShapeDtypeStruct((n_pad, d_out), jnp.float32),
        grid_spec=grid_spec,
        compiler_params=pltpu.CompilerParams(
            dimension_semantics=("parallel",),
            vmem_limit_bytes=48 * 1024 * 1024,
        ),
        cost_estimate=pl.CostEstimate(
            flops=flops, transcendentals=0, bytes_accessed=bytes_accessed),
    )(a_pad, x_pad, w_pad, alpha)


@functools.partial(jax.jit, static_argnames=("block_rows",))
def gcn_for_feature_2(A, X, params, *, block_rows=512):
    """A: (N, N) adjacency.  X: (N, input_dim).  Returns (N, out_dim)."""
    n = A.shape[0]
    d_in = X.shape[1]

    # Pre-transpose PyTorch (out, in) weights to (in, out).  (One-time cost;
    # could be hoisted outside jit for a long-lived model.)
    w1 = params["w1"].T                                     # (input_dim, hidden_dim)
    w2 = params["w2"].T                                     # (hidden_dim, out_dim)
    hidden = w1.shape[1]
    out_dim = w2.shape[1]

    # Row-tile size: sublane-aligned, and chosen so the padded node count stays
    # a multiple of both tm and 128 (lane-dense A loads, even grid division).
    n_128 = _round_up(n, 128)
    if block_rows >= 128:
        tm = min((block_rows // 128) * 128, n_128)
    else:
        tm = max(8, (block_rows // 8) * 8)
        while 128 % tm:
            tm -= 8
    n_pad = _round_up(n_128, tm)

    # Lane-dense outputs: pad feature widths up to multiples of 128 with zeros.
    h_pad = _round_up(hidden, 128)
    o_pad = _round_up(out_dim, 128)

    f32 = jnp.float32
    a_pad = jnp.zeros((n_pad, n_pad), f32).at[:n, :n].set(A.astype(f32))
    x_pad = jnp.zeros((n_pad, d_in), f32).at[:n, :].set(X.astype(f32))
    w1_pad = jnp.zeros((d_in, h_pad), f32).at[:, :hidden].set(w1.astype(f32))
    w2_pad = jnp.zeros((h_pad, o_pad), f32).at[:hidden, :out_dim].set(w2.astype(f32))

    alpha1 = params["alpha1"].reshape((1,)).astype(f32)
    alpha2 = params["alpha2"].reshape((1,)).astype(f32)

    # Layer 1: (n_pad, h_pad);  padded rows/cols stay exactly zero.
    f1 = _gcn_layer(a_pad, x_pad, w1_pad, alpha1, tm=tm)
    # Layer 2: (n_pad, o_pad).
    out = _gcn_layer(a_pad, f1, w2_pad, alpha2, tm=tm)

    return out[:n, :out_dim]


def init_params(key, input_dim, hidden_dim, out_dim):
    """Deterministic synthetic parameters matching the PyTorch module shapes."""
    k1, k2 = jax.random.split(key)
    s1 = 1.0 / math.sqrt(input_dim)
    s2 = 1.0 / math.sqrt(hidden_dim)
    return {
        # nn.Linear(in, out, bias=False).weight has shape (out, in)
        "w1": jax.random.uniform(k1, (hidden_dim, input_dim), jnp.float32, -s1, s1),
        "alpha1": jnp.full((1,), 0.25, jnp.float32),   # nn.PReLU() default init
        "w2": jax.random.uniform(k2, (out_dim, hidden_dim), jnp.float32, -s2, s2),
        "alpha2": jnp.full((1,), 0.25, jnp.float32),
    }


def _reference(A, X, p):
    prelu = lambda x, a: jnp.where(x >= 0, x, a * x)
    f = A @ X
    f = prelu(f @ p["w1"].T, p["alpha1"][0])
    f = A @ f
    return prelu(f @ p["w2"].T, p["alpha2"][0])


if __name__ == "__main__":
    input_dim, hidden_dim, out_dim = 32, 16, 8
    n_nodes = 16

    key = jax.random.PRNGKey(0)
    k_a, k_x, k_p = jax.random.split(key, 3)

    A = jax.random.uniform(k_a, (n_nodes, n_nodes), jnp.float32)
    A = A / jnp.sum(A, axis=1, keepdims=True)        # row-normalized adjacency
    X = jax.random.normal(k_x, (n_nodes, input_dim), jnp.float32)
    params = init_params(k_p, input_dim, hidden_dim, out_dim)

    out = gcn_for_feature_2(A, X, params)
    jax.block_until_ready(out)

    ref = _reference(A, X, params)
    assert out.shape == (n_nodes, out_dim)
    assert jnp.allclose(out, ref, atol=1e-4, rtol=1e-4), float(
        jnp.max(jnp.abs(out - ref)))

    print("KERNEL_OK")
</pallas_src>

<mosaic_0001>
module attributes {stable_mosaic.version = 11 : i64} {
  func.func @_gcn_layer_kernel(%arg0: i32, %arg1: memref<128x128xf32, #tpu.memory_space<vmem>>, %arg2: memref<128x128xf32, #tpu.memory_space<vmem>>, %arg3: memref<128x128xf32, #tpu.memory_space<vmem>>, %arg4: memref<1xf32, #tpu.memory_space<smem>>, %arg5: memref<128x128xf32, #tpu.memory_space<vmem>>) attributes {dimension_semantics = [#tpu.dimension_semantics<parallel>], iteration_bounds = array<i64: 1>, scalar_prefetch = 0 : i64, scratch_operands = 0 : i64, tpu.core_type = #tpu.core_type<tc>, window_params = [{transform_indices = @transform_0, window_bounds = array<i64: 128, 128>}, {pipeline_mode = #tpu.pipeline_mode<synchronous>, transform_indices = @transform_1, window_bounds = array<i64: 128, 128>}, {pipeline_mode = #tpu.pipeline_mode<synchronous>, transform_indices = @transform_2, window_bounds = array<i64: 128, 128>}, {transform_indices = @transform_3, window_bounds = array<i64: 1>}, {transform_indices = @transform_4, window_bounds = array<i64: 128, 128>}]} {
    %c0 = arith.constant 0 : index
    %c0_0 = arith.constant 0 : index
    %0 = vector.load %arg1[%c0, %c0_0] : memref<128x128xf32, #tpu.memory_space<vmem>>, vector<128x128xf32>
    %c0_1 = arith.constant 0 : index
    %c0_2 = arith.constant 0 : index
    %1 = vector.load %arg2[%c0_1, %c0_2] : memref<128x128xf32, #tpu.memory_space<vmem>>, vector<128x128xf32>
    %cst = arith.constant dense<0.000000e+00> : vector<128x128xf32>
    %2 = tpu.matmul %0, %1, %cst {dimension_numbers = #tpu.dot_dimension_numbers<[1], [0], [0], [1], [0, 0, 1, 1], [], []>} : vector<128x128xf32>, vector<128x128xf32>, vector<128x128xf32> -> vector<128x128xf32>
    %c0_3 = arith.constant 0 : index
    %c0_4 = arith.constant 0 : index
    %3 = vector.load %arg3[%c0_3, %c0_4] : memref<128x128xf32, #tpu.memory_space<vmem>>, vector<128x128xf32>
    %cst_5 = arith.constant dense<0.000000e+00> : vector<128x128xf32>
    %4 = tpu.matmul %2, %3, %cst_5 {dimension_numbers = #tpu.dot_dimension_numbers<[1], [0], [0], [1], [0, 0, 1, 1], [], []>} : vector<128x128xf32>, vector<128x128xf32>, vector<128x128xf32> -> vector<128x128xf32>
    %c0_6 = arith.constant 0 : index
    %5 = memref.load %arg4[%c0_6] : memref<1xf32, #tpu.memory_space<smem>>
    %cst_7 = arith.constant 0.000000e+00 : f32
    %6 = vector.broadcast %cst_7 : f32 to vector<128x128xf32>
    %7 = arith.cmpf oge, %4, %6 : vector<128x128xf32>
    %8 = vector.broadcast %5 : f32 to vector<128x128xf32>
    %9 = arith.mulf %8, %4 : vector<128x128xf32>
    %10 = arith.select %7, %4, %9 : vector<128x128xi1>, vector<128x128xf32>
    %c0_8 = arith.constant 0 : index
    %c0_9 = arith.constant 0 : index
    %11 = vector.load %arg5[%c0_8, %c0_9] : memref<128x128xf32, #tpu.memory_space<vmem>>, vector<128x128xf32>
    tpu.vector_store %arg5[%c0_8, %c0_9], %10 {strides = array<i32>} : memref<128x128xf32, #tpu.memory_space<vmem>>, vector<128x128xf32>,
    return
  }
  func.func @transform_0(%arg0: i32) -> (i32, i32) {
    %c0_i32 = arith.constant 0 : i32
    %c0_i32_0 = arith.constant 0 : i32
    return %arg0, %c0_i32 : i32, i32
  }
  func.func @transform_1(%arg0: i32) -> (i32, i32) {
    %c0_i32 = arith.constant 0 : i32
    %c0_i32_0 = arith.constant 0 : i32
    %c0_i32_1 = arith.constant 0 : i32
    return %c0_i32, %c0_i32_0 : i32, i32
  }
  func.func @transform_2(%arg0: i32) -> (i32, i32) {
    %c0_i32 = arith.constant 0 : i32
    %c0_i32_0 = arith.constant 0 : i32
    %c0_i32_1 = arith.constant 0 : i32
    return %c0_i32, %c0_i32_0 : i32, i32
  }
  func.func @transform_3(%arg0: i32) -> i32 {
    %c0_i32 = arith.constant 0 : i32
    %c0_i32_0 = arith.constant 0 : i32
    return %c0_i32 : i32
  }
  func.func @transform_4(%arg0: i32) -> (i32, i32) {
    %c0_i32 = arith.constant 0 : i32
    %c0_i32_0 = arith.constant 0 : i32
    return %arg0, %c0_i32 : i32, i32
  }
}

module attributes {stable_mosaic.version = 11 : i64} {
  func.func @_gcn_layer_kernel(%arg0: i32, %arg1: memref<128x128xf32, #tpu.memory_space<vmem>>, %arg2: memref<128x32xf32, #tpu.memory_space<vmem>>, %arg3: memref<32x128xf32, #tpu.memory_space<vmem>>, %arg4: memref<1xf32, #tpu.memory_space<smem>>, %arg5: memref<128x128xf32, #tpu.memory_space<vmem>>) attributes {dimension_semantics = [#tpu.dimension_semantics<parallel>], iteration_bounds = array<i64: 1>, scalar_prefetch = 0 : i64, scratch_operands = 0 : i64, tpu.core_type = #tpu.core_type<tc>, window_params = [{transform_indices = @transform_0, window_bounds = array<i64: 128, 128>}, {pipeline_mode = #tpu.pipeline_mode<synchronous>, transform_indices = @transform_1, window_bounds = array<i64: 128, 32>}, {pipeline_mode = #tpu.pipeline_mode<synchronous>, transform_indices = @transform_2, window_bounds = array<i64: 32, 128>}, {transform_indices = @transform_3, window_bounds = array<i64: 1>}, {transform_indices = @transform_4, window_bounds = array<i64: 128, 128>}]} {
    %c0 = arith.constant 0 : index
    %c0_0 = arith.constant 0 : index
    %0 = vector.load %arg1[%c0, %c0_0] : memref<128x128xf32, #tpu.memory_space<vmem>>, vector<128x128xf32>
    %c0_1 = arith.constant 0 : index
    %c0_2 = arith.constant 0 : index
    %1 = vector.load %arg2[%c0_1, %c0_2] : memref<128x32xf32, #tpu.memory_space<vmem>>, vector<128x32xf32>
    %cst = arith.constant dense<0.000000e+00> : vector<128x32xf32>
    %2 = tpu.matmul %0, %1, %cst {dimension_numbers = #tpu.dot_dimension_numbers<[1], [0], [0], [1], [0, 0, 1, 1], [], []>} : vector<128x128xf32>, vector<128x32xf32>, vector<128x32xf32> -> vector<128x32xf32>
    %c0_3 = arith.constant 0 : index
    %c0_4 = arith.constant 0 : index
    %3 = vector.load %arg3[%c0_3, %c0_4] : memref<32x128xf32, #tpu.memory_space<vmem>>, vector<32x128xf32>
    %cst_5 = arith.constant dense<0.000000e+00> : vector<128x128xf32>
    %4 = tpu.matmul %2, %3, %cst_5 {dimension_numbers = #tpu.dot_dimension_numbers<[1], [0], [0], [1], [0, 0, 1, 1], [], []>} : vector<128x32xf32>, vector<32x128xf32>, vector<128x128xf32> -> vector<128x128xf32>
    %c0_6 = arith.constant 0 : index
    %5 = memref.load %arg4[%c0_6] : memref<1xf32, #tpu.memory_space<smem>>
    %cst_7 = arith.constant 0.000000e+00 : f32
    %6 = vector.broadcast %cst_7 : f32 to vector<128x128xf32>
    %7 = arith.cmpf oge, %4, %6 : vector<128x128xf32>
    %8 = vector.broadcast %5 : f32 to vector<128x128xf32>
    %9 = arith.mulf %8, %4 : vector<128x128xf32>
    %10 = arith.select %7, %4, %9 : vector<128x128xi1>, vector<128x128xf32>
    %c0_8 = arith.constant 0 : index
    %c0_9 = arith.constant 0 : index
    %11 = vector.load %arg5[%c0_8, %c0_9] : memref<128x128xf32, #tpu.memory_space<vmem>>, vector<128x128xf32>
    tpu.vector_store %arg5[%c0_8, %c0_9], %10 {strides = array<i32>} : memref<128x128xf32, #tpu.memory_space<vmem>>, vector<128x128xf32>,
    return
  }
  func.func @transform_0(%arg0: i32) -> (i32, i32) {
    %c0_i32 = arith.constant 0 : i32
    %c0_i32_0 = arith.constant 0 : i32
    return %arg0, %c0_i32 : i32, i32
  }
  func.func @transform_1(%arg0: i32) -> (i32, i32) {
    %c0_i32 = arith.constant 0 : i32
    %c0_i32_0 = arith.constant 0 : i32
    %c0_i32_1 = arith.constant 0 : i32
    return %c0_i32, %c0_i32_0 : i32, i32
  }
  func.func @transform_2(%arg0: i32) -> (i32, i32) {
    %c0_i32 = arith.constant 0 : i32
    %c0_i32_0 = arith.constant 0 : i32
    %c0_i32_1 = arith.constant 0 : i32
    return %c0_i32, %c0_i32_0 : i32, i32
  }
  func.func @transform_3(%arg0: i32) -> i32 {
    %c0_i32 = arith.constant 0 : i32
    %c0_i32_0 = arith.constant 0 : i32
    return %c0_i32 : i32
  }
  func.func @transform_4(%arg0: i32) -> (i32, i32) {
    %c0_i32 = arith.constant 0 : i32
    %c0_i32_0 = arith.constant 0 : i32
    return %arg0, %c0_i32 : i32, i32
  }
}

</mosaic_0001>

<llo_original>
// kernel: gcn_for_feature_2.3
$region0: #{gcn_for_feature_2.3}
  #allocation0 [shape = 'u32[]', space=smem, size = 0x4, offset = 0x4, fixed_abs, tag = 'smem constant byte address 0x4 - core index']
  #allocation1 [shape = 'u32[72,128]{1,0:T(1,128)}', space=vmem, size = 0x9000, scoped, tag = 'internal scratch']
  #allocation2 [shape = 'f32[1]{0:T(128)S(6)}', space=smem, size = 0x200, scoped, tag = 'scoped memory for gcn_for_feature_2.3']
  %s0 = inlined_call_operand.vmem [shape: f32[128,128], index: 0, kind: input, shape index: {}]
  %s1 = inlined_call_operand.vmem [shape: f32[128,128], index: 1, kind: input, shape index: {}]
  %s2 = inlined_call_operand.vmem [shape: f32[128,128], index: 2, kind: input, shape index: {}]
  %s3 = inlined_call_operand.<no memory space> [shape: f32[1], index: 3, kind: input, shape index: {}]
  %s4 = inlined_call_operand.vmem [shape: f32[128,128], index: 4, kind: output, shape index: {}]
  %s5 = sld [smem:[#allocation0]]
  $region26: #{gcn_for_feature_2.3} parent=0
    _
  %s7 = ssub.s32 1, %s5
  %s8 = scalar_select 0, %s7, %s5
  %9 = sst [smem:[#allocation2]] %s3
  // Predicated region
  $region2: #{gcn_for_feature_2.3} parent=0 // pred_check
    _
  $region3: #{gcn_for_feature_2.3} parent=0 // pred_check_branch
    %11 = sbr.rel (0) target = $region5
  $region4: #{gcn_for_feature_2.3} parent=0 // pred_region
    _
  $region5: #{gcn_for_feature_2.3} parent=0 // pred_fallthru
    _
  // Predicated region
  $region6: #{gcn_for_feature_2.3} parent=0 // pred_check
    _
  $region7: #{gcn_for_feature_2.3} parent=0 // pred_check_branch
    %13 = sbr.rel (0) target = $region9
  $region8: #{gcn_for_feature_2.3} parent=0 // pred_region
    _
  $region9: #{gcn_for_feature_2.3} parent=0 // pred_fallthru
    _
  // Predicated region
  $region10: #{gcn_for_feature_2.3} parent=0 // pred_check
    _
  $region11: #{gcn_for_feature_2.3} parent=0 // pred_check_branch
    %15 = sbr.rel (0) target = $region13
  $region12: #{gcn_for_feature_2.3} parent=0 // pred_region
    _
  $region13: #{gcn_for_feature_2.3} parent=0 // pred_fallthru
    _
  // Predicated region
  $region14: #{gcn_for_feature_2.3} parent=0 // pred_check
    _
  $region15: #{gcn_for_feature_2.3} parent=0 // pred_check_branch
    %17 = sbr.rel (0) target = $region17
  $region16: #{gcn_for_feature_2.3} parent=0 // pred_region
    _
  $region17: #{gcn_for_feature_2.3} parent=0 // pred_fallthru
    _
  %v18 = vld [vmem:[%s0] sm:$0xff]
  %v19 = vld [vmem:[%s0 + $0x8] sm:$0xff]
  %v20 = vld [vmem:[%s0 + $0x10] sm:$0xff]
  %v21 = vld [vmem:[%s0 + $0x18] sm:$0xff]
  %v22 = vld [vmem:[%s0 + $0x20] sm:$0xff]
  %v23 = vld [vmem:[%s0 + $0x28] sm:$0xff]
  %v24 = vld [vmem:[%s0 + $0x30] sm:$0xff]
  %v25 = vld [vmem:[%s0 + $0x38] sm:$0xff]
  %v26 = vld [vmem:[%s0 + $0x40] sm:$0xff]
  %v27 = vld [vmem:[%s0 + $0x48] sm:$0xff]
  %v28 = vld [vmem:[%s0 + $0x50] sm:$0xff]
  %v29 = vld [vmem:[%s0 + $0x58] sm:$0xff]
  %v30 = vld [vmem:[%s0 + $0x60] sm:$0xff]
  %v31 = vld [vmem:[%s0 + $0x68] sm:$0xff]
  %v32 = vld [vmem:[%s0 + $0x70] sm:$0xff]
  %v33 = vld [vmem:[%s0 + $0x78] sm:$0xff]
  %v34 = vld [vmem:[%s1] sm:$0xff]
  %v35 = vld [vmem:[%s1 + $0x8] sm:$0xff]
  %v36 = vld [vmem:[%s1 + $0x10] sm:$0xff]
  %v37 = vld [vmem:[%s1 + $0x18] sm:$0xff]
  %v38 = vld [vmem:[%s1 + $0x20] sm:$0xff]
  %v39 = vld [vmem:[%s1 + $0x28] sm:$0xff]
  %v40 = vld [vmem:[%s1 + $0x30] sm:$0xff]
  %v41 = vld [vmem:[%s1 + $0x38] sm:$0xff]
  %v42 = vld [vmem:[%s1 + $0x40] sm:$0xff]
  %v43 = vld [vmem:[%s1 + $0x48] sm:$0xff]
  %v44 = vld [vmem:[%s1 + $0x50] sm:$0xff]
  %v45 = vld [vmem:[%s1 + $0x58] sm:$0xff]
  %v46 = vld [vmem:[%s1 + $0x60] sm:$0xff]
  %v47 = vld [vmem:[%s1 + $0x68] sm:$0xff]
  %v48 = vld [vmem:[%s1 + $0x70] sm:$0xff]
  %v49 = vld [vmem:[%s1 + $0x78] sm:$0xff]
  %50 = vmatpush.msra.mxu0 %v49
  %51 = vmatpush.msra.mxu0 %v48
  %52 = vmatpush.msra.mxu0 %v47
  %53 = vmatpush.msra.mxu0 %v46
  %54 = vmatpush.msra.mxu0 %v45
  %55 = vmatpush.msra.mxu0 %v44
  %56 = vmatpush.msra.mxu0 %v43
  %57 = vmatpush.msra.mxu0 %v42
  %58 = vmatpush.msra.mxu0 %v41
  %59 = vmatpush.msra.mxu0 %v40
  %60 = vmatpush.msra.mxu0 %v39
  %61 = vmatpush.msra.mxu0 %v38
  %62 = vmatpush.msra.mxu0 %v37
  %63 = vmatpush.msra.mxu0 %v36
  %64 = vmatpush.msra.mxu0 %v35
  %65 = vmatpush.msra.mxu0 %v34
  %66 = vmatmul.f32.gmra.mxu0 %v18
  %v67 = vpop.f32.mrf.mxu0
  %v68 = vadd.f32 0.0, %v67
  %69 = vmatmul.f32.gmra.mxu0 %v19
  %v70 = vpop.f32.mrf.mxu0
  %v71 = vadd.f32 0.0, %v70
  %72 = vmatmul.f32.gmra.mxu0 %v20
  %v73 = vpop.f32.mrf.mxu0
  %v74 = vadd.f32 0.0, %v73
  %75 = vmatmul.f32.gmra.mxu0 %v21
  %v76 = vpop.f32.mrf.mxu0
  %v77 = vadd.f32 0.0, %v76
  %78 = vmatmul.f32.gmra.mxu0 %v22
  %v79 = vpop.f32.mrf.mxu0
  %v80 = vadd.f32 0.0, %v79
  %81 = vmatmul.f32.gmra.mxu0 %v23
  %v82 = vpop.f32.mrf.mxu0
  %v83 = vadd.f32 0.0, %v82
  %84 = vmatmul.f32.gmra.mxu0 %v24
  %v85 = vpop.f32.mrf.mxu0
  %v86 = vadd.f32 0.0, %v85
  %87 = vmatmul.f32.gmra.mxu0 %v25
  %v88 = vpop.f32.mrf.mxu0
  %v89 = vadd.f32 0.0, %v88
  %90 = vmatmul.f32.gmra.mxu0 %v26
  %v91 = vpop.f32.mrf.mxu0
  %v92 = vadd.f32 0.0, %v91
  %93 = vmatmul.f32.gmra.mxu0 %v27
  %v94 = vpop.f32.mrf.mxu0
  %v95 = vadd.f32 0.0, %v94
  %96 = vmatmul.f32.gmra.mxu0 %v28
  %v97 = vpop.f32.mrf.mxu0
  %v98 = vadd.f32 0.0, %v97
  %99 = vmatmul.f32.gmra.mxu0 %v29
  %v100 = vpop.f32.mrf.mxu0
  %v101 = vadd.f32 0.0, %v100
  %102 = vmatmul.f32.gmra.mxu0 %v30
  %v103 = vpop.f32.mrf.mxu0
  %v104 = vadd.f32 0.0, %v103
  %105 = vmatmul.f32.gmra.mxu0 %v31
  %v106 = vpop.f32.mrf.mxu0
  %v107 = vadd.f32 0.0, %v106
  %108 = vmatmul.f32.gmra.mxu0 %v32
  %v109 = vpop.f32.mrf.mxu0
  %v110 = vadd.f32 0.0, %v109
  %111 = vmatmul.f32.gmra.mxu0 %v33
  %v112 = vpop.f32.mrf.mxu0
  %v113 = vadd.f32 0.0, %v112
  %114 = vdwg.mxu0
  %v115 = vld [vmem:[%s2] sm:$0xff]
  %v116 = vld [vmem:[%s2 + $0x8] sm:$0xff]
  %v117 = vld [vmem:[%s2 + $0x10] sm:$0xff]
  %v118 = vld [vmem:[%s2 + $0x18] sm:$0xff]
  %v119 = vld [vmem:[%s2 + $0x20] sm:$0xff]
  %v120 = vld [vmem:[%s2 + $0x28] sm:$0xff]
  %v121 = vld [vmem:[%s2 + $0x30] sm:$0xff]
  %v122 = vld [vmem:[%s2 + $0x38] sm:$0xff]
  %v123 = vld [vmem:[%s2 + $0x40] sm:$0xff]
  %v124 = vld [vmem:[%s2 + $0x48] sm:$0xff]
  %v125 = vld [vmem:[%s2 + $0x50] sm:$0xff]
  %v126 = vld [vmem:[%s2 + $0x58] sm:$0xff]
  %v127 = vld [vmem:[%s2 + $0x60] sm:$0xff]
  %v128 = vld [vmem:[%s2 + $0x68] sm:$0xff]
  %v129 = vld [vmem:[%s2 + $0x70] sm:$0xff]
  %v130 = vld [vmem:[%s2 + $0x78] sm:$0xff]
  %131 = vmatpush.msra.mxu0 %v130
  %132 = vmatpush.msra.mxu0 %v129
  %133 = vmatpush.msra.mxu0 %v128
  %134 = vmatpush.msra.mxu0 %v127
  %135 = vmatpush.msra.mxu0 %v126
  %136 = vmatpush.msra.mxu0 %v125
  %137 = vmatpush.msra.mxu0 %v124
  %138 = vmatpush.msra.mxu0 %v123
  %139 = vmatpush.msra.mxu0 %v122
  %140 = vmatpush.msra.mxu0 %v121
  %141 = vmatpush.msra.mxu0 %v120
  %142 = vmatpush.msra.mxu0 %v119
  %143 = vmatpush.msra.mxu0 %v118
  %144 = vmatpush.msra.mxu0 %v117
  %145 = vmatpush.msra.mxu0 %v116
  %146 = vmatpush.msra.mxu0 %v115
  %147 = vmatmul.f32.gmra.mxu0 %v68
  %v148 = vpop.f32.mrf.mxu0
  %v149 = vadd.f32 0.0, %v148
  %150 = vmatmul.f32.gmra.mxu0 %v71
  %v151 = vpop.f32.mrf.mxu0
  %v152 = vadd.f32 0.0, %v151
  %153 = vmatmul.f32.gmra.mxu0 %v74
  %v154 = vpop.f32.mrf.mxu0
  %v155 = vadd.f32 0.0, %v154
  %156 = vmatmul.f32.gmra.mxu0 %v77
  %v157 = vpop.f32.mrf.mxu0
  %v158 = vadd.f32 0.0, %v157
  %159 = vmatmul.f32.gmra.mxu0 %v80
  %v160 = vpop.f32.mrf.mxu0
  %v161 = vadd.f32 0.0, %v160
  %162 = vmatmul.f32.gmra.mxu0 %v83
  %v163 = vpop.f32.mrf.mxu0
  %v164 = vadd.f32 0.0, %v163
  %165 = vmatmul.f32.gmra.mxu0 %v86
  %v166 = vpop.f32.mrf.mxu0
  %v167 = vadd.f32 0.0, %v166
  %168 = vmatmul.f32.gmra.mxu0 %v89
  %v169 = vpop.f32.mrf.mxu0
  %v170 = vadd.f32 0.0, %v169
  %171 = vmatmul.f32.gmra.mxu0 %v92
  %v172 = vpop.f32.mrf.mxu0
  %v173 = vadd.f32 0.0, %v172
  %174 = vmatmul.f32.gmra.mxu0 %v95
  %v175 = vpop.f32.mrf.mxu0
  %v176 = vadd.f32 0.0, %v175
  %177 = vmatmul.f32.gmra.mxu0 %v98
  %v178 = vpop.f32.mrf.mxu0
  %v179 = vadd.f32 0.0, %v178
  %180 = vmatmul.f32.gmra.mxu0 %v101
  %v181 = vpop.f32.mrf.mxu0
  %v182 = vadd.f32 0.0, %v181
  %183 = vmatmul.f32.gmra.mxu0 %v104
  %v184 = vpop.f32.mrf.mxu0
  %v185 = vadd.f32 0.0, %v184
  %186 = vmatmul.f32.gmra.mxu0 %v107
  %v187 = vpop.f32.mrf.mxu0
  %v188 = vadd.f32 0.0, %v187
  %189 = vmatmul.f32.gmra.mxu0 %v110
  %v190 = vpop.f32.mrf.mxu0
  %v191 = vadd.f32 0.0, %v190
  %192 = vmatmul.f32.gmra.mxu0 %v113
  %v193 = vpop.f32.mrf.mxu0
  %v194 = vadd.f32 0.0, %v193
  %195 = vdwg.mxu0
  %s196 = sld [smem:[#allocation2]]
  %vm197 = vcmp.ge.f32.partialorder %v149, 0.0
  %vm198 = vcmp.ge.f32.partialorder %v152, 0.0
  %vm199 = vcmp.ge.f32.partialorder %v155, 0.0
  %vm200 = vcmp.ge.f32.partialorder %v158, 0.0
  %vm201 = vcmp.ge.f32.partialorder %v161, 0.0
  %vm202 = vcmp.ge.f32.partialorder %v164, 0.0
  %vm203 = vcmp.ge.f32.partialorder %v167, 0.0
  %vm204 = vcmp.ge.f32.partialorder %v170, 0.0
  %vm205 = vcmp.ge.f32.partialorder %v173, 0.0
  %vm206 = vcmp.ge.f32.partialorder %v176, 0.0
  %vm207 = vcmp.ge.f32.partialorder %v179, 0.0
  %vm208 = vcmp.ge.f32.partialorder %v182, 0.0
  %vm209 = vcmp.ge.f32.partialorder %v185, 0.0
  %vm210 = vcmp.ge.f32.partialorder %v188, 0.0
  %vm211 = vcmp.ge.f32.partialorder %v191, 0.0
  %vm212 = vcmp.ge.f32.partialorder %v194, 0.0
  %v213 = vstv %s196
  %v214 = vmul.f32 %v213, %v149
  %v215 = vmul.f32 %v213, %v152
  %v216 = vmul.f32 %v213, %v155
  %v217 = vmul.f32 %v213, %v158
  %v218 = vmul.f32 %v213, %v161
  %v219 = vmul.f32 %v213, %v164
  %v220 = vmul.f32 %v213, %v167
  %v221 = vmul.f32 %v213, %v170
  %v222 = vmul.f32 %v213, %v173
  %v223 = vmul.f32 %v213, %v176
  %v224 = vmul.f32 %v213, %v179
  %v225 = vmul.f32 %v213, %v182
  %v226 = vmul.f32 %v213, %v185
  %v227 = vmul.f32 %v213, %v188
  %v228 = vmul.f32 %v213, %v191
  %v229 = vmul.f32 %v213, %v194
  %v230 = vsel %vm197, %v149, %v214
  %v231 = vsel %vm198, %v152, %v215
  %v232 = vsel %vm199, %v155, %v216
  %v233 = vsel %vm200, %v158, %v217
  %v234 = vsel %vm201, %v161, %v218
  %v235 = vsel %vm202, %v164, %v219
  %v236 = vsel %vm203, %v167, %v220
  %v237 = vsel %vm204, %v170, %v221
  %v238 = vsel %vm205, %v173, %v222
  %v239 = vsel %vm206, %v176, %v223
  %v240 = vsel %vm207, %v179, %v224
  %v241 = vsel %vm208, %v182, %v225
  %v242 = vsel %vm209, %v185, %v226
  %v243 = vsel %vm210, %v188, %v227
  %v244 = vsel %vm211, %v191, %v228
  %v245 = vsel %vm212, %v194, %v229
  %246 = vst [vmem:[%s4] sm:$0xff] %v230
  %247 = vst [vmem:[%s4 + $0x8] sm:$0xff] %v231
  %248 = vst [vmem:[%s4 + $0x10] sm:$0xff] %v232
  %249 = vst [vmem:[%s4 + $0x18] sm:$0xff] %v233
  %250 = vst [vmem:[%s4 + $0x20] sm:$0xff] %v234
  %251 = vst [vmem:[%s4 + $0x28] sm:$0xff] %v235
  %252 = vst [vmem:[%s4 + $0x30] sm:$0xff] %v236
  %253 = vst [vmem:[%s4 + $0x38] sm:$0xff] %v237
  %254 = vst [vmem:[%s4 + $0x40] sm:$0xff] %v238
  %255 = vst [vmem:[%s4 + $0x48] sm:$0xff] %v239
  %256 = vst [vmem:[%s4 + $0x50] sm:$0xff] %v240
  %257 = vst [vmem:[%s4 + $0x58] sm:$0xff] %v241
  %258 = vst [vmem:[%s4 + $0x60] sm:$0xff] %v242
  %259 = vst [vmem:[%s4 + $0x68] sm:$0xff] %v243
  %260 = vst [vmem:[%s4 + $0x70] sm:$0xff] %v244
  %261 = vst [vmem:[%s4 + $0x78] sm:$0xff] %v245
  // Predicated region
  $region18: #{gcn_for_feature_2.3} parent=0 // pred_check
    _
  $region19: #{gcn_for_feature_2.3} parent=0 // pred_check_branch
    %263 = sbr.rel (0) target = $region21
  $region20: #{gcn_for_feature_2.3} parent=0 // pred_region
    _
  $region21: #{gcn_for_feature_2.3} parent=0 // pred_fallthru
    _
  // Predicated region
  $region22: #{gcn_for_feature_2.3} parent=0 // pred_check
    _
  $region23: #{gcn_for_feature_2.3} parent=0 // pred_check_branch
    %265 = sbr.rel (0) target = $region25
  $region24: #{gcn_for_feature_2.3} parent=0 // pred_region
    _
  $region25: #{gcn_for_feature_2.3} parent=0 // pred_fallthru
    _

// kernel: gcn_for_feature_2.2
$region0: #{gcn_for_feature_2.2}
  #allocation0 [shape = 'u32[]', space=smem, size = 0x4, offset = 0x4, fixed_abs, tag = 'smem constant byte address 0x4 - core index']
  #allocation1 [shape = 'u32[72,128]{1,0:T(1,128)}', space=vmem, size = 0x9000, scoped, tag = 'internal scratch']
  #allocation2 [shape = 'f32[1]{0:T(128)S(6)}', space=smem, size = 0x200, scoped, tag = 'scoped memory for gcn_for_feature_2.2']
  %s0 = inlined_call_operand.vmem [shape: f32[128,128], index: 0, kind: input, shape index: {}]
  %s1 = inlined_call_operand.vmem [shape: f32[128,32], index: 1, kind: input, shape index: {}]
  %s2 = inlined_call_operand.vmem [shape: f32[32,128], index: 2, kind: input, shape index: {}]
  %s3 = inlined_call_operand.<no memory space> [shape: f32[1], index: 3, kind: input, shape index: {}]
  %s4 = inlined_call_operand.vmem [shape: f32[128,128], index: 4, kind: output, shape index: {}]
  %s5 = sld [smem:[#allocation0]]
  $region26: #{gcn_for_feature_2.2} parent=0
    _
  %s7 = ssub.s32 1, %s5
  %s8 = scalar_select 0, %s7, %s5
  %9 = sst [smem:[#allocation2]] %s3
  // Predicated region
  $region2: #{gcn_for_feature_2.2} parent=0 // pred_check
    _
  $region3: #{gcn_for_feature_2.2} parent=0 // pred_check_branch
    %11 = sbr.rel (0) target = $region5
  $region4: #{gcn_for_feature_2.2} parent=0 // pred_region
    _
  $region5: #{gcn_for_feature_2.2} parent=0 // pred_fallthru
    _
  // Predicated region
  $region6: #{gcn_for_feature_2.2} parent=0 // pred_check
    _
  $region7: #{gcn_for_feature_2.2} parent=0 // pred_check_branch
    %13 = sbr.rel (0) target = $region9
  $region8: #{gcn_for_feature_2.2} parent=0 // pred_region
    _
  $region9: #{gcn_for_feature_2.2} parent=0 // pred_fallthru
    _
  // Predicated region
  $region10: #{gcn_for_feature_2.2} parent=0 // pred_check
    _
  $region11: #{gcn_for_feature_2.2} parent=0 // pred_check_branch
    %15 = sbr.rel (0) target = $region13
  $region12: #{gcn_for_feature_2.2} parent=0 // pred_region
    _
  $region13: #{gcn_for_feature_2.2} parent=0 // pred_fallthru
    _
  // Predicated region
  $region14: #{gcn_for_feature_2.2} parent=0 // pred_check
    _
  $region15: #{gcn_for_feature_2.2} parent=0 // pred_check_branch
    %17 = sbr.rel (0) target = $region17
  $region16: #{gcn_for_feature_2.2} parent=0 // pred_region
    _
  $region17: #{gcn_for_feature_2.2} parent=0 // pred_fallthru
    _
  %v18 = vld [vmem:[%s0] sm:$0xff]
  %v19 = vld [vmem:[%s0 + $0x8] sm:$0xff]
  %v20 = vld [vmem:[%s0 + $0x10] sm:$0xff]
  %v21 = vld [vmem:[%s0 + $0x18] sm:$0xff]
  %v22 = vld [vmem:[%s0 + $0x20] sm:$0xff]
  %v23 = vld [vmem:[%s0 + $0x28] sm:$0xff]
  %v24 = vld [vmem:[%s0 + $0x30] sm:$0xff]
  %v25 = vld [vmem:[%s0 + $0x38] sm:$0xff]
  %v26 = vld [vmem:[%s0 + $0x40] sm:$0xff]
  %v27 = vld [vmem:[%s0 + $0x48] sm:$0xff]
  %v28 = vld [vmem:[%s0 + $0x50] sm:$0xff]
  %v29 = vld [vmem:[%s0 + $0x58] sm:$0xff]
  %v30 = vld [vmem:[%s0 + $0x60] sm:$0xff]
  %v31 = vld [vmem:[%s0 + $0x68] sm:$0xff]
  %v32 = vld [vmem:[%s0 + $0x70] sm:$0xff]
  %v33 = vld [vmem:[%s0 + $0x78] sm:$0xff]
  %v34 = vld [vmem:[%s1] sm:$0xff]
  %v35 = vld [vmem:[%s1 + $0x8] sm:$0xff]
  %v36 = vld [vmem:[%s1 + $0x10] sm:$0xff]
  %v37 = vld [vmem:[%s1 + $0x18] sm:$0xff]
  %v38 = vld [vmem:[%s1 + $0x20] sm:$0xff]
  %v39 = vld [vmem:[%s1 + $0x28] sm:$0xff]
  %v40 = vld [vmem:[%s1 + $0x30] sm:$0xff]
  %v41 = vld [vmem:[%s1 + $0x38] sm:$0xff]
  %v42 = vld [vmem:[%s1 + $0x40] sm:$0xff]
  %v43 = vld [vmem:[%s1 + $0x48] sm:$0xff]
  %v44 = vld [vmem:[%s1 + $0x50] sm:$0xff]
  %v45 = vld [vmem:[%s1 + $0x58] sm:$0xff]
  %v46 = vld [vmem:[%s1 + $0x60] sm:$0xff]
  %v47 = vld [vmem:[%s1 + $0x68] sm:$0xff]
  %v48 = vld [vmem:[%s1 + $0x70] sm:$0xff]
  %v49 = vld [vmem:[%s1 + $0x78] sm:$0xff]
  %50 = vmatpush.msra.mxu0 %v49
  %51 = vmatpush.msra.mxu0 %v48
  %52 = vmatpush.msra.mxu0 %v47
  %53 = vmatpush.msra.mxu0 %v46
  %54 = vmatpush.msra.mxu0 %v45
  %55 = vmatpush.msra.mxu0 %v44
  %56 = vmatpush.msra.mxu0 %v43
  %57 = vmatpush.msra.mxu0 %v42
  %58 = vmatpush.msra.mxu0 %v41
  %59 = vmatpush.msra.mxu0 %v40
  %60 = vmatpush.msra.mxu0 %v39
  %61 = vmatpush.msra.mxu0 %v38
  %62 = vmatpush.msra.mxu0 %v37
  %63 = vmatpush.msra.mxu0 %v36
  %64 = vmatpush.msra.mxu0 %v35
  %65 = vmatpush.msra.mxu0 %v34
  %66 = vmatmul.f32.gmra.mxu0 %v18
  %v67 = vpop.f32.mrf.mxu0
  %v68 = vadd.f32 0.0, %v67
  %69 = vmatmul.f32.gmra.mxu0 %v19
  %v70 = vpop.f32.mrf.mxu0
  %v71 = vadd.f32 0.0, %v70
  %72 = vmatmul.f32.gmra.mxu0 %v20
  %v73 = vpop.f32.mrf.mxu0
  %v74 = vadd.f32 0.0, %v73
  %75 = vmatmul.f32.gmra.mxu0 %v21
  %v76 = vpop.f32.mrf.mxu0
  %v77 = vadd.f32 0.0, %v76
  %78 = vmatmul.f32.gmra.mxu0 %v22
  %v79 = vpop.f32.mrf.mxu0
  %v80 = vadd.f32 0.0, %v79
  %81 = vmatmul.f32.gmra.mxu0 %v23
  %v82 = vpop.f32.mrf.mxu0
  %v83 = vadd.f32 0.0, %v82
  %84 = vmatmul.f32.gmra.mxu0 %v24
  %v85 = vpop.f32.mrf.mxu0
  %v86 = vadd.f32 0.0, %v85
  %87 = vmatmul.f32.gmra.mxu0 %v25
  %v88 = vpop.f32.mrf.mxu0
  %v89 = vadd.f32 0.0, %v88
  %90 = vmatmul.f32.gmra.mxu0 %v26
  %v91 = vpop.f32.mrf.mxu0
  %v92 = vadd.f32 0.0, %v91
  %93 = vmatmul.f32.gmra.mxu0 %v27
  %v94 = vpop.f32.mrf.mxu0
  %v95 = vadd.f32 0.0, %v94
  %96 = vmatmul.f32.gmra.mxu0 %v28
  %v97 = vpop.f32.mrf.mxu0
  %v98 = vadd.f32 0.0, %v97
  %99 = vmatmul.f32.gmra.mxu0 %v29
  %v100 = vpop.f32.mrf.mxu0
  %v101 = vadd.f32 0.0, %v100
  %102 = vmatmul.f32.gmra.mxu0 %v30
  %v103 = vpop.f32.mrf.mxu0
  %v104 = vadd.f32 0.0, %v103
  %105 = vmatmul.f32.gmra.mxu0 %v31
  %v106 = vpop.f32.mrf.mxu0
  %v107 = vadd.f32 0.0, %v106
  %108 = vmatmul.f32.gmra.mxu0 %v32
  %v109 = vpop.f32.mrf.mxu0
  %v110 = vadd.f32 0.0, %v109
  %111 = vmatmul.f32.gmra.mxu0 %v33
  %v112 = vpop.f32.mrf.mxu0
  %v113 = vadd.f32 0.0, %v112
  %114 = vdwg.mxu0
  %v115 = vld [vmem:[%s2] sm:$0xff]
  %v116 = vld [vmem:[%s2 + $0x8] sm:$0xff]
  %v117 = vld [vmem:[%s2 + $0x10] sm:$0xff]
  %v118 = vld [vmem:[%s2 + $0x18] sm:$0xff]
  %vm119 = vcmask 261120
  %v121 = vsel %vm119, %v68, 0
  %v124 = vsel %vm119, %v71, 0
  %v127 = vsel %vm119, %v74, 0
  %v130 = vsel %vm119, %v77, 0
  %v133 = vsel %vm119, %v80, 0
  %v136 = vsel %vm119, %v83, 0
  %v139 = vsel %vm119, %v86, 0
  %v142 = vsel %vm119, %v89, 0
  %v145 = vsel %vm119, %v92, 0
  %v148 = vsel %vm119, %v95, 0
  %v151 = vsel %vm119, %v98, 0
  %v154 = vsel %vm119, %v101, 0
  %v157 = vsel %vm119, %v104, 0
  %v160 = vsel %vm119, %v107, 0
  %v163 = vsel %vm119, %v110, 0
  %v166 = vsel %vm119, %v113, 0
  %168 = vmatpush.msra.mxu0 0.0
  %169 = vmatpush.msra.mxu0 0.0
  %170 = vmatpush.msra.mxu0 0.0
  %171 = vmatpush.msra.mxu0 0.0
  %172 = vmatpush.msra.mxu0 0.0
  %173 = vmatpush.msra.mxu0 0.0
  %174 = vmatpush.msra.mxu0 0.0
  %175 = vmatpush.msra.mxu0 0.0
  %176 = vmatpush.msra.mxu0 0.0
  %177 = vmatpush.msra.mxu0 0.0
  %178 = vmatpush.msra.mxu0 0.0
  %179 = vmatpush.msra.mxu0 0.0
  %180 = vmatpush.msra.mxu0 %v118
  %181 = vmatpush.msra.mxu0 %v117
  %182 = vmatpush.msra.mxu0 %v116
  %183 = vmatpush.msra.mxu0 %v115
  %184 = vmatmul.f32.gmra.mxu0 %v121
  %v185 = vpop.f32.mrf.mxu0
  %v186 = vadd.f32 0.0, %v185
  %187 = vmatmul.f32.gmra.mxu0 %v124
  %v188 = vpop.f32.mrf.mxu0
  %v189 = vadd.f32 0.0, %v188
  %190 = vmatmul.f32.gmra.mxu0 %v127
  %v191 = vpop.f32.mrf.mxu0
  %v192 = vadd.f32 0.0, %v191
  %193 = vmatmul.f32.gmra.mxu0 %v130
  %v194 = vpop.f32.mrf.mxu0
  %v195 = vadd.f32 0.0, %v194
  %196 = vmatmul.f32.gmra.mxu0 %v133
  %v197 = vpop.f32.mrf.mxu0
  %v198 = vadd.f32 0.0, %v197
  %199 = vmatmul.f32.gmra.mxu0 %v136
  %v200 = vpop.f32.mrf.mxu0
  %v201 = vadd.f32 0.0, %v200
  %202 = vmatmul.f32.gmra.mxu0 %v139
  %v203 = vpop.f32.mrf.mxu0
  %v204 = vadd.f32 0.0, %v203
  %205 = vmatmul.f32.gmra.mxu0 %v142
  %v206 = vpop.f32.mrf.mxu0
  %v207 = vadd.f32 0.0, %v206
  %208 = vmatmul.f32.gmra.mxu0 %v145
  %v209 = vpop.f32.mrf.mxu0
  %v210 = vadd.f32 0.0, %v209
  %211 = vmatmul.f32.gmra.mxu0 %v148
  %v212 = vpop.f32.mrf.mxu0
  %v213 = vadd.f32 0.0, %v212
  %214 = vmatmul.f32.gmra.mxu0 %v151
  %v215 = vpop.f32.mrf.mxu0
  %v216 = vadd.f32 0.0, %v215
  %217 = vmatmul.f32.gmra.mxu0 %v154
  %v218 = vpop.f32.mrf.mxu0
  %v219 = vadd.f32 0.0, %v218
  %220 = vmatmul.f32.gmra.mxu0 %v157
  %v221 = vpop.f32.mrf.mxu0
  %v222 = vadd.f32 0.0, %v221
  %223 = vmatmul.f32.gmra.mxu0 %v160
  %v224 = vpop.f32.mrf.mxu0
  %v225 = vadd.f32 0.0, %v224
  %226 = vmatmul.f32.gmra.mxu0 %v163
  %v227 = vpop.f32.mrf.mxu0
  %v228 = vadd.f32 0.0, %v227
  %229 = vmatmul.f32.gmra.mxu0 %v166
  %v230 = vpop.f32.mrf.mxu0
  %v231 = vadd.f32 0.0, %v230
  %232 = vdwg.mxu0
  %s233 = sld [smem:[#allocation2]]
  %vm234 = vcmp.ge.f32.partialorder %v186, 0.0
  %vm235 = vcmp.ge.f32.partialorder %v189, 0.0
  %vm236 = vcmp.ge.f32.partialorder %v192, 0.0
  %vm237 = vcmp.ge.f32.partialorder %v195, 0.0
  %vm238 = vcmp.ge.f32.partialorder %v198, 0.0
  %vm239 = vcmp.ge.f32.partialorder %v201, 0.0
  %vm240 = vcmp.ge.f32.partialorder %v204, 0.0
  %vm241 = vcmp.ge.f32.partialorder %v207, 0.0
  %vm242 = vcmp.ge.f32.partialorder %v210, 0.0
  %vm243 = vcmp.ge.f32.partialorder %v213, 0.0
  %vm244 = vcmp.ge.f32.partialorder %v216, 0.0
  %vm245 = vcmp.ge.f32.partialorder %v219, 0.0
  %vm246 = vcmp.ge.f32.partialorder %v222, 0.0
  %vm247 = vcmp.ge.f32.partialorder %v225, 0.0
  %vm248 = vcmp.ge.f32.partialorder %v228, 0.0
  %vm249 = vcmp.ge.f32.partialorder %v231, 0.0
  %v250 = vstv %s233
  %v251 = vmul.f32 %v250, %v186
  %v252 = vmul.f32 %v250, %v189
  %v253 = vmul.f32 %v250, %v192
  %v254 = vmul.f32 %v250, %v195
  %v255 = vmul.f32 %v250, %v198
  %v256 = vmul.f32 %v250, %v201
  %v257 = vmul.f32 %v250, %v204
  %v258 = vmul.f32 %v250, %v207
  %v259 = vmul.f32 %v250, %v210
  %v260 = vmul.f32 %v250, %v213
  %v261 = vmul.f32 %v250, %v216
  %v262 = vmul.f32 %v250, %v219
  %v263 = vmul.f32 %v250, %v222
  %v264 = vmul.f32 %v250, %v225
  %v265 = vmul.f32 %v250, %v228
  %v266 = vmul.f32 %v250, %v231
  %v267 = vsel %vm234, %v186, %v251
  %v268 = vsel %vm235, %v189, %v252
  %v269 = vsel %vm236, %v192, %v253
  %v270 = vsel %vm237, %v195, %v254
  %v271 = vsel %vm238, %v198, %v255
  %v272 = vsel %vm239, %v201, %v256
  %v273 = vsel %vm240, %v204, %v257
  %v274 = vsel %vm241, %v207, %v258
  %v275 = vsel %vm242, %v210, %v259
  %v276 = vsel %vm243, %v213, %v260
  %v277 = vsel %vm244, %v216, %v261
  %v278 = vsel %vm245, %v219, %v262
  %v279 = vsel %vm246, %v222, %v263
  %v280 = vsel %vm247, %v225, %v264
  %v281 = vsel %vm248, %v228, %v265
  %v282 = vsel %vm249, %v231, %v266
  %283 = vst [vmem:[%s4] sm:$0xff] %v267
  %284 = vst [vmem:[%s4 + $0x8] sm:$0xff] %v268
  %285 = vst [vmem:[%s4 + $0x10] sm:$0xff] %v269
  %286 = vst [vmem:[%s4 + $0x18] sm:$0xff] %v270
  %287 = vst [vmem:[%s4 + $0x20] sm:$0xff] %v271
  %288 = vst [vmem:[%s4 + $0x28] sm:$0xff] %v272
  %289 = vst [vmem:[%s4 + $0x30] sm:$0xff] %v273
  %290 = vst [vmem:[%s4 + $0x38] sm:$0xff] %v274
  %291 = vst [vmem:[%s4 + $0x40] sm:$0xff] %v275
  %292 = vst [vmem:[%s4 + $0x48] sm:$0xff] %v276
  %293 = vst [vmem:[%s4 + $0x50] sm:$0xff] %v277
  %294 = vst [vmem:[%s4 + $0x58] sm:$0xff] %v278
  %295 = vst [vmem:[%s4 + $0x60] sm:$0xff] %v279
  %296 = vst [vmem:[%s4 + $0x68] sm:$0xff] %v280
  %297 = vst [vmem:[%s4 + $0x70] sm:$0xff] %v281
  %298 = vst [vmem:[%s4 + $0x78] sm:$0xff] %v282
  // Predicated region
  $region18: #{gcn_for_feature_2.2} parent=0 // pred_check
    _
  $region19: #{gcn_for_feature_2.2} parent=0 // pred_check_branch
    %300 = sbr.rel (0) target = $region21
  $region20: #{gcn_for_feature_2.2} parent=0 // pred_region
    _
  $region21: #{gcn_for_feature_2.2} parent=0 // pred_fallthru
    _
  // Predicated region
  $region22: #{gcn_for_feature_2.2} parent=0 // pred_check
    _
  $region23: #{gcn_for_feature_2.2} parent=0 // pred_check_branch
    %302 = sbr.rel (0) target = $region25
  $region24: #{gcn_for_feature_2.2} parent=0 // pred_region
    _
  $region25: #{gcn_for_feature_2.2} parent=0 // pred_fallthru
    _

</llo_original>
